<compile_context>
chip_gen: v5e
topology: v5e:2x2
jax: 0.10.0
libtpu: 0.0.40
codegen_flags: <defaults>
</compile_context>

<pallas_src>
import functools

import jax
import jax.numpy as jnp
from jax import lax
from jax.experimental import pallas as pl
from jax.experimental.pallas import tpu as pltpu


def _round_up(v, m):
    return ((v + m - 1) // m) * m


def _biaffine_kernel(x_ref, u_ref, y_ref, o_ref, *, out_size, bias_x, bias_y,
                     compute_dtype):
    """Per (batch, x-tile, y-tile) biaffine score.

    x_ref: (1, tm, in_x)   u_ref: (O, Dx, Dy)   y_ref: (1, tn, in_y)
    o_ref: (1, O, tm, tn)  -- lane-dense along tn.
    """
    xb = x_ref[0].astype(compute_dtype)                      # (tm, in_x)
    yb = y_ref[0].astype(compute_dtype)                      # (tn, in_y)
    if bias_x:                                               # fold bias column
        xb = jnp.concatenate(
            [xb, jnp.ones((xb.shape[0], 1), dtype=compute_dtype)], axis=-1)
    if bias_y:
        yb = jnp.concatenate(
            [yb, jnp.ones((yb.shape[0], 1), dtype=compute_dtype)], axis=-1)

    for o in range(out_size):                                # small static loop
        u_o = u_ref[o].astype(compute_dtype)                 # (Dx, Dy)
        # (tm, Dx) @ (Dx, Dy) -> (tm, Dy), f32 accumulation on the MXU.
        t = jnp.dot(xb, u_o, preferred_element_type=jnp.float32)
        # Contract last dim of t with last dim of yb (no explicit transpose).
        r = lax.dot_general(
            t.astype(compute_dtype), yb,
            dimension_numbers=(((1,), (1,)), ((), ())),
            preferred_element_type=jnp.float32)              # (tm, tn)
        o_ref[0, o] = r.astype(o_ref.dtype)                  # lane-dense store


def biaffine_pallas(x, y, U, bias_x=True, bias_y=True, *,
                    tile_m=256, tile_n=256, compute_dtype=None,
                    vmem_limit_bytes=None):
    """x: [B,Sx,in], y: [B,Sy,in], U: [in+bx, out, in+by] -> [B,Sx,Sy,out]."""
    B, Sx, in_x = x.shape
    By, Sy, in_y = y.shape
    assert B == By
    Dx, O, Dy = U.shape
    assert Dx == in_x + int(bias_x) and Dy == in_y + int(bias_y)
    assert tile_m % 8 == 0 and tile_n % 128 == 0

    if compute_dtype is None:
        compute_dtype = x.dtype          # pass jnp.bfloat16 for 2x MXU on v6e/v7x

    # Sequence tiling.  If a sequence fits a single tile, use its full extent
    # (exempt from the (8,128) rule); otherwise use aligned tiles + zero pad.
    if Sx <= tile_m:
        tm, Sx_p = Sx, Sx
    else:
        tm, Sx_p = tile_m, _round_up(Sx, tile_m)
    if Sy <= tile_n:
        tn, Sy_p = Sy, Sy
    else:
        tn, Sy_p = tile_n, _round_up(Sy, tile_n)

    if Sx_p != Sx:
        x = jnp.pad(x, ((0, 0), (0, Sx_p - Sx), (0, 0)))
    if Sy_p != Sy:
        y = jnp.pad(y, ((0, 0), (0, Sy_p - Sy), (0, 0)))

    # (Dx, O, Dy) -> (O, Dx, Dy): static leading-dim indexing in the kernel.
    u_t = jnp.transpose(U, (1, 0, 2))

    grid = (B, Sx_p // tm, Sy_p // tn)

    flops = 2 * B * O * (Sx_p * Dx * Dy + Sx_p * Dy * Sy_p)
    bytes_accessed = (x.size * x.dtype.itemsize + y.size * y.dtype.itemsize +
                      U.size * U.dtype.itemsize + B * O * Sx_p * Sy_p * 4)
    cost = pl.CostEstimate(flops=flops, transcendentals=0,
                           bytes_accessed=bytes_accessed)

    kernel = functools.partial(
        _biaffine_kernel, out_size=O, bias_x=bias_x, bias_y=bias_y,
        compute_dtype=compute_dtype)

    out = pl.pallas_call(
        kernel,
        out_shape=jax.ShapeDtypeStruct((B, O, Sx_p, Sy_p), jnp.float32),
        grid_spec=pltpu.PrefetchScalarGridSpec(
            num_scalar_prefetch=0,
            grid=grid,
            in_specs=[
                pl.BlockSpec((1, tm, in_x), lambda b, i, j: (b, i, 0)),
                pl.BlockSpec((O, Dx, Dy), lambda b, i, j: (0, 0, 0)),
                pl.BlockSpec((1, tn, in_y), lambda b, i, j: (b, j, 0)),
            ],
            out_specs=pl.BlockSpec((1, O, tm, tn),
                                   lambda b, i, j: (b, 0, i, j)),
        ),
        compiler_params=pltpu.CompilerParams(
            dimension_semantics=("parallel", "parallel", "parallel"),
            vmem_limit_bytes=vmem_limit_bytes),
        cost_estimate=cost,
    )(x, u_t, y)

    # Crop padding, then cheap XLA transpose back to PyTorch's bxyo layout.
    out = out[:, :, :Sx, :Sy]
    return jnp.transpose(out, (0, 2, 3, 1))


if __name__ == "__main__":
    # Small shapes consistent with the module's forward.
    B, S, in_size, out_size = 2, 8, 32, 4
    bias_x, bias_y = True, True

    key = jax.random.PRNGKey(0)
    kx, ky, ku = jax.random.split(key, 3)
    x = jax.random.normal(kx, (B, S, in_size), dtype=jnp.float32)
    y = jax.random.normal(ky, (B, S, in_size), dtype=jnp.float32)
    # Deterministic parameter init (module's __init__ only defines the shape).
    U = 0.02 * jax.random.normal(
        ku, (in_size + int(bias_x), out_size, in_size + int(bias_y)),
        dtype=jnp.float32)

    out = biaffine_pallas(x, y, U, bias_x=bias_x, bias_y=bias_y)
    out = jax.block_until_ready(out)

    # Pure-JAX reference for sanity.
    xb = jnp.concatenate([x, jnp.ones_like(x[..., :1])], axis=-1)
    yb = jnp.concatenate([y, jnp.ones_like(y[..., :1])], axis=-1)
    ref = jnp.einsum('bxi,ioj,byj->bxyo', xb, U, yb)
    assert out.shape == (B, S, S, out_size)
    assert jnp.allclose(out, ref, atol=1e-4, rtol=1e-4)

    print("KERNEL_OK")
</pallas_src>

<mosaic_0001>
module attributes {stable_mosaic.version = 11 : i64} {
  func.func @_biaffine_kernel(%arg0: i32, %arg1: i32, %arg2: i32, %arg3: memref<1x8x32xf32, #tpu.memory_space<vmem>>, %arg4: memref<4x33x33xf32, #tpu.memory_space<vmem>>, %arg5: memref<1x8x32xf32, #tpu.memory_space<vmem>>, %arg6: memref<1x4x8x8xf32, #tpu.memory_space<vmem>>) attributes {dimension_semantics = [#tpu.dimension_semantics<parallel>, #tpu.dimension_semantics<parallel>, #tpu.dimension_semantics<parallel>], iteration_bounds = array<i64: 2, 1, 1>, scalar_prefetch = 0 : i64, scratch_operands = 0 : i64, tpu.core_type = #tpu.core_type<tc>, window_params = [{transform_indices = @transform_0, window_bounds = array<i64: 1, 8, 32>}, {pipeline_mode = #tpu.pipeline_mode<synchronous>, transform_indices = @transform_1, window_bounds = array<i64: 4, 33, 33>}, {transform_indices = @transform_2, window_bounds = array<i64: 1, 8, 32>}, {transform_indices = @transform_3, window_bounds = array<i64: 1, 4, 8, 8>}]} {
    %c0 = arith.constant 0 : index
    %c0_0 = arith.constant 0 : index
    %c0_1 = arith.constant 0 : index
    %0 = vector.load %arg3[%c0, %c0_0, %c0_1] : memref<1x8x32xf32, #tpu.memory_space<vmem>>, vector<1x8x32xf32>
    %1 = vector.shape_cast %0 : vector<1x8x32xf32> to vector<8x32xf32>
    %c0_2 = arith.constant 0 : index
    %c0_3 = arith.constant 0 : index
    %c0_4 = arith.constant 0 : index
    %2 = vector.load %arg5[%c0_2, %c0_3, %c0_4] : memref<1x8x32xf32, #tpu.memory_space<vmem>>, vector<1x8x32xf32>
    %3 = vector.shape_cast %2 : vector<1x8x32xf32> to vector<8x32xf32>
    %cst = arith.constant 1.000000e+00 : f32
    %4 = vector.broadcast %cst : f32 to vector<8x1xf32>
    %5 = tpu.concatenate %1, %4 in 1 : vector<8x32xf32>, vector<8x1xf32> -> vector<8x33xf32>
    %cst_5 = arith.constant 1.000000e+00 : f32
    %6 = vector.broadcast %cst_5 : f32 to vector<8x1xf32>
    %7 = tpu.concatenate %3, %6 in 1 : vector<8x32xf32>, vector<8x1xf32> -> vector<8x33xf32>
    %c0_6 = arith.constant 0 : index
    %c0_7 = arith.constant 0 : index
    %c0_8 = arith.constant 0 : index
    %8 = vector.load %arg4[%c0_6, %c0_7, %c0_8] : memref<4x33x33xf32, #tpu.memory_space<vmem>>, vector<1x33x33xf32>
    %9 = vector.shape_cast %8 : vector<1x33x33xf32> to vector<33x33xf32>
    %cst_9 = arith.constant dense<0.000000e+00> : vector<8x33xf32>
    %10 = tpu.matmul %5, %9, %cst_9 {dimension_numbers = #tpu.dot_dimension_numbers<[1], [0], [0], [1], [0, 0, 1, 1], [], []>} : vector<8x33xf32>, vector<33x33xf32>, vector<8x33xf32> -> vector<8x33xf32>
    %cst_10 = arith.constant dense<0.000000e+00> : vector<8x8xf32>
    %11 = tpu.matmul %10, %7, %cst_10 {dimension_numbers = #tpu.dot_dimension_numbers<[1], [1], [0], [0], [0, 0, 1, 0], [], []>} : vector<8x33xf32>, vector<8x33xf32>, vector<8x8xf32> -> vector<8x8xf32>
    %c0_11 = arith.constant 0 : index
    %c0_12 = arith.constant 0 : index
    %c0_13 = arith.constant 0 : index
    %c0_14 = arith.constant 0 : index
    %12 = vector.load %arg6[%c0_11, %c0_12, %c0_13, %c0_14] : memref<1x4x8x8xf32, #tpu.memory_space<vmem>>, vector<1x1x8x8xf32>
    %13 = vector.shape_cast %12 : vector<1x1x8x8xf32> to vector<8x8xf32>
    %14 = vector.shape_cast %11 : vector<8x8xf32> to vector<1x1x8x8xf32>
    tpu.vector_store %arg6[%c0_11, %c0_12, %c0_13, %c0_14], %14 {strides = array<i32>} : memref<1x4x8x8xf32, #tpu.memory_space<vmem>>, vector<1x1x8x8xf32>,
    %c1 = arith.constant 1 : index
    %c0_15 = arith.constant 0 : index
    %c0_16 = arith.constant 0 : index
    %15 = vector.load %arg4[%c1, %c0_15, %c0_16] : memref<4x33x33xf32, #tpu.memory_space<vmem>>, vector<1x33x33xf32>
    %16 = vector.shape_cast %15 : vector<1x33x33xf32> to vector<33x33xf32>
    %cst_17 = arith.constant dense<0.000000e+00> : vector<8x33xf32>
    %17 = tpu.matmul %5, %16, %cst_17 {dimension_numbers = #tpu.dot_dimension_numbers<[1], [0], [0], [1], [0, 0, 1, 1], [], []>} : vector<8x33xf32>, vector<33x33xf32>, vector<8x33xf32> -> vector<8x33xf32>
    %cst_18 = arith.constant dense<0.000000e+00> : vector<8x8xf32>
    %18 = tpu.matmul %17, %7, %cst_18 {dimension_numbers = #tpu.dot_dimension_numbers<[1], [1], [0], [0], [0, 0, 1, 0], [], []>} : vector<8x33xf32>, vector<8x33xf32>, vector<8x8xf32> -> vector<8x8xf32>
    %c0_19 = arith.constant 0 : index
    %c1_20 = arith.constant 1 : index
    %c0_21 = arith.constant 0 : index
    %c0_22 = arith.constant 0 : index
    %19 = vector.load %arg6[%c0_19, %c1_20, %c0_21, %c0_22] : memref<1x4x8x8xf32, #tpu.memory_space<vmem>>, vector<1x1x8x8xf32>
    %20 = vector.shape_cast %19 : vector<1x1x8x8xf32> to vector<8x8xf32>
    %21 = vector.shape_cast %18 : vector<8x8xf32> to vector<1x1x8x8xf32>
    tpu.vector_store %arg6[%c0_19, %c1_20, %c0_21, %c0_22], %21 {strides = array<i32>} : memref<1x4x8x8xf32, #tpu.memory_space<vmem>>, vector<1x1x8x8xf32>,
    %c2 = arith.constant 2 : index
    %c0_23 = arith.constant 0 : index
    %c0_24 = arith.constant 0 : index
    %22 = vector.load %arg4[%c2, %c0_23, %c0_24] : memref<4x33x33xf32, #tpu.memory_space<vmem>>, vector<1x33x33xf32>
    %23 = vector.shape_cast %22 : vector<1x33x33xf32> to vector<33x33xf32>
    %cst_25 = arith.constant dense<0.000000e+00> : vector<8x33xf32>
    %24 = tpu.matmul %5, %23, %cst_25 {dimension_numbers = #tpu.dot_dimension_numbers<[1], [0], [0], [1], [0, 0, 1, 1], [], []>} : vector<8x33xf32>, vector<33x33xf32>, vector<8x33xf32> -> vector<8x33xf32>
    %cst_26 = arith.constant dense<0.000000e+00> : vector<8x8xf32>
    %25 = tpu.matmul %24, %7, %cst_26 {dimension_numbers = #tpu.dot_dimension_numbers<[1], [1], [0], [0], [0, 0, 1, 0], [], []>} : vector<8x33xf32>, vector<8x33xf32>, vector<8x8xf32> -> vector<8x8xf32>
    %c0_27 = arith.constant 0 : index
    %c2_28 = arith.constant 2 : index
    %c0_29 = arith.constant 0 : index
    %c0_30 = arith.constant 0 : index
    %26 = vector.load %arg6[%c0_27, %c2_28, %c0_29, %c0_30] : memref<1x4x8x8xf32, #tpu.memory_space<vmem>>, vector<1x1x8x8xf32>
    %27 = vector.shape_cast %26 : vector<1x1x8x8xf32> to vector<8x8xf32>
    %28 = vector.shape_cast %25 : vector<8x8xf32> to vector<1x1x8x8xf32>
    tpu.vector_store %arg6[%c0_27, %c2_28, %c0_29, %c0_30], %28 {strides = array<i32>} : memref<1x4x8x8xf32, #tpu.memory_space<vmem>>, vector<1x1x8x8xf32>,
    %c3 = arith.constant 3 : index
    %c0_31 = arith.constant 0 : index
    %c0_32 = arith.constant 0 : index
    %29 = vector.load %arg4[%c3, %c0_31, %c0_32] : memref<4x33x33xf32, #tpu.memory_space<vmem>>, vector<1x33x33xf32>
    %30 = vector.shape_cast %29 : vector<1x33x33xf32> to vector<33x33xf32>
    %cst_33 = arith.constant dense<0.000000e+00> : vector<8x33xf32>
    %31 = tpu.matmul %5, %30, %cst_33 {dimension_numbers = #tpu.dot_dimension_numbers<[1], [0], [0], [1], [0, 0, 1, 1], [], []>} : vector<8x33xf32>, vector<33x33xf32>, vector<8x33xf32> -> vector<8x33xf32>
    %cst_34 = arith.constant dense<0.000000e+00> : vector<8x8xf32>
    %32 = tpu.matmul %31, %7, %cst_34 {dimension_numbers = #tpu.dot_dimension_numbers<[1], [1], [0], [0], [0, 0, 1, 0], [], []>} : vector<8x33xf32>, vector<8x33xf32>, vector<8x8xf32> -> vector<8x8xf32>
    %c0_35 = arith.constant 0 : index
    %c3_36 = arith.constant 3 : index
    %c0_37 = arith.constant 0 : index
    %c0_38 = arith.constant 0 : index
    %33 = vector.load %arg6[%c0_35, %c3_36, %c0_37, %c0_38] : memref<1x4x8x8xf32, #tpu.memory_space<vmem>>, vector<1x1x8x8xf32>
    %34 = vector.shape_cast %33 : vector<1x1x8x8xf32> to vector<8x8xf32>
    %35 = vector.shape_cast %32 : vector<8x8xf32> to vector<1x1x8x8xf32>
    tpu.vector_store %arg6[%c0_35, %c3_36, %c0_37, %c0_38], %35 {strides = array<i32>} : memref<1x4x8x8xf32, #tpu.memory_space<vmem>>, vector<1x1x8x8xf32>,
    return
  }
  func.func @transform_0(%arg0: i32, %arg1: i32, %arg2: i32) -> (i32, i32, i32) {
    %c0_i32 = arith.constant 0 : i32
    %c0_i32_0 = arith.constant 0 : i32
    return %arg0, %arg1, %c0_i32 : i32, i32, i32
  }
  func.func @transform_1(%arg0: i32, %arg1: i32, %arg2: i32) -> (i32, i32, i32) {
    %c0_i32 = arith.constant 0 : i32
    %c0_i32_0 = arith.constant 0 : i32
    %c0_i32_1 = arith.constant 0 : i32
    %c0_i32_2 = arith.constant 0 : i32
    return %c0_i32, %c0_i32_0, %c0_i32_1 : i32, i32, i32
  }
  func.func @transform_2(%arg0: i32, %arg1: i32, %arg2: i32) -> (i32, i32, i32) {
    %c0_i32 = arith.constant 0 : i32
    %c0_i32_0 = arith.constant 0 : i32
    return %arg0, %arg2, %c0_i32 : i32, i32, i32
  }
  func.func @transform_3(%arg0: i32, %arg1: i32, %arg2: i32) -> (i32, i32, i32, i32) {
    %c0_i32 = arith.constant 0 : i32
    %c0_i32_0 = arith.constant 0 : i32
    return %arg0, %c0_i32, %arg1, %arg2 : i32, i32, i32, i32
  }
}

</mosaic_0001>

<llo_original>
// kernel: tpu_custom_call.1
$region0: #{tpu_custom_call.1}
  #allocation0 [shape = 'u32[]', space=smem, size = 0x4, offset = 0x4, fixed_abs, tag = 'smem constant byte address 0x4 - core index']
  #allocation1 [shape = 'u32[72,128]{1,0:T(1,128)}', space=vmem, size = 0x9000, scoped, tag = 'internal scratch']
  %s0 = inlined_call_operand.vmem [shape: f32[2,8,32], index: 0, kind: input, shape index: {}]
  %s1 = inlined_call_operand.vmem [shape: f32[4,33,33], index: 1, kind: input, shape index: {}]
  %s2 = inlined_call_operand.vmem [shape: f32[2,8,32], index: 2, kind: input, shape index: {}]
  %s3 = inlined_call_operand.hbm [shape: f32[2,4,8,8], index: 3, kind: output, shape index: {}]
  %s4 = sld [smem:[#allocation0]]
  $region45: #{tpu_custom_call.1} parent=0
    _
  %s6 = ssub.s32 1, %s4
  %s7 = scalar_select 0, %s6, %s4
  $region1: #{tpu_custom_call.1} parent=0
    #allocation2 [shape = 'u8[32768]{0}', space=vmem, size = 0x8000, scoped, tag = 'output window, operand 0']
    #allocation3 [shape = 's32[2]{0}', space=sflag, size = 0x8, scoped, tag = 'scoped memory for tpu_custom_call.1']
    %8 = vsyncpa [#allocation3], 0
    %s9 = scalar_lea.sflag [#allocation3], 1
    %10 = vsyncpa %s9, 0
    loop: start=0, step=1, limit=4
    $region2: #{tpu_custom_call.1} parent=1 // loop_pre_header
      _
    $region3: #{tpu_custom_call.1} parent=1 // loop_header
      %s12 = sphi 0, %s16
      %p13 = scmp.ge.s32.totalorder %s12, 4
      %s19 = sphi 0, %s38
      %s20 = sphi 0, %s34
      %s21 = sphi 0, %s30
      %s22 = sphi 0, %s19
      %s23 = sphi 0, %s20
      %s24 = sphi 0, %s21
      %s25 = sphi 0, %s22
      %s26 = sphi 0, %s23
      %s27 = sphi 0, %s24
      %s43 = sphi 0, %s45
      %s46 = sphi 0, %s43
      %s47 = sphi 0, %s46
      %s63 = sphi 0, %s47
      %s67 = sphi 0, %s67
      %s69 = sphi 0, %s67
      %s70 = sphi 0, %s69
      %s84 = sphi 0, %s70
      %s92 = sphi 0, %s94
      %s95 = sphi 0, %s92
      %s96 = sphi 0, %s95
      %s112 = sphi 0, %s96
      %s122 = sphi 0, %s124
      %s125 = sphi 0, %s122
      %s126 = sphi 0, %s125
      %s142 = sphi 0, %s126
    $region4: #{tpu_custom_call.1} parent=1 // loop_header_branch
      %15 = sbr.rel (%p13) target = $region8
    $region5: #{tpu_custom_call.1} parent=1 // loop_body
      %s17 = ssub.s32 %s12, 1
      %s18 = ssub.s32 %s12, 2
      %s28 = sadd.s32 1, %s21
      %p29 = scmp.ge.s32.totalorder %s28, 1
      %s30 = scalar_select %p29, 0, %s28
      %s31 = sadd.s32 1, %s20
      %s32 = scalar_select %p29, %s31, %s20
      %p33 = scmp.ge.s32.totalorder %s32, 1
      %s34 = scalar_select %p33, 0, %s32
      %s35 = sadd.s32 1, %s19
      %s36 = scalar_select %p33, %s35, %s19
      %p37 = scmp.ge.s32.totalorder %s36, 2
      %s38 = scalar_select %p37, 0, %s36
      %s39 = ssub.s32 %s19, %s38
      %s40 = ssub.s32 %s20, %s34
      %s41 = sor.u32 %s39, %s40
      %p42 = scmp.eq.s32.totalorder %s41, 0
      %s44 = sadd.s32 %s43, 1
      %s45 = scalar_select %p42, %s43, %s44
      %p48 = pneg %p42
      %p49 = scmp.eq.s32.totalorder %s12, 1
      %p50 = por %p48, %p49
      %p51 = scmp.ne.s32.totalorder %s43, %s46
      %p52 = scmp.eq.s32.totalorder %s12, 0
      %p53 = por %p51, %p52
      %p54 = scmp.ne.s32.totalorder %s43, %s46
      %p55 = scmp.eq.s32.totalorder %s17, 1
      %p56 = por %p54, %p55
      %p57 = scmp.ne.s32.totalorder %s46, %s47
      %p58 = scmp.eq.s32.totalorder %s17, 0
      %p59 = por %p57, %p58
      %p60 = scmp.ne.s32.totalorder %s46, %s47
      %p61 = scmp.eq.s32.totalorder %s18, 1
      %p62 = por %p60, %p61
      %p64 = scmp.ne.s32.totalorder %s47, %s63
      %p65 = scmp.eq.s32.totalorder %s18, 0
      %p66 = por %p64, %p65
      %s68 = sadd.s32 %s67, 1
      %p71 = scmp.eq.s32.totalorder %s12, 1
      %p72 = scmp.ne.s32.totalorder %s67, %s69
      %p73 = scmp.eq.s32.totalorder %s12, 0
      %p74 = por %p72, %p73
      %p75 = scmp.ne.s32.totalorder %s67, %s69
      %p76 = scmp.eq.s32.totalorder %s17, 1
      %p77 = por %p75, %p76
      %p78 = scmp.ne.s32.totalorder %s69, %s70
      %p79 = scmp.eq.s32.totalorder %s17, 0
      %p80 = por %p78, %p79
      %p81 = scmp.ne.s32.totalorder %s69, %s70
      %p82 = scmp.eq.s32.totalorder %s18, 1
      %p83 = por %p81, %p82
      %p85 = scmp.ne.s32.totalorder %s70, %s84
      %p86 = scmp.eq.s32.totalorder %s18, 0
      %p87 = por %p85, %p86
      %s88 = ssub.s32 %s19, %s38
      %s89 = ssub.s32 %s21, %s30
      %s90 = sor.u32 %s88, %s89
      %p91 = scmp.eq.s32.totalorder %s90, 0
      %s93 = sadd.s32 %s92, 1
      %s94 = scalar_select %p91, %s92, %s93
      %p97 = pneg %p91
      %p98 = scmp.eq.s32.totalorder %s12, 1
      %p99 = por %p97, %p98
      %p100 = scmp.ne.s32.totalorder %s92, %s95
      %p101 = scmp.eq.s32.totalorder %s12, 0
      %p102 = por %p100, %p101
      %p103 = scmp.ne.s32.totalorder %s92, %s95
      %p104 = scmp.eq.s32.totalorder %s17, 1
      %p105 = por %p103, %p104
      %p106 = scmp.ne.s32.totalorder %s95, %s96
      %p107 = scmp.eq.s32.totalorder %s17, 0
      %p108 = por %p106, %p107
      %p109 = scmp.ne.s32.totalorder %s95, %s96
      %p110 = scmp.eq.s32.totalorder %s18, 1
      %p111 = por %p109, %p110
      %p113 = scmp.ne.s32.totalorder %s96, %s112
      %p114 = scmp.eq.s32.totalorder %s18, 0
      %p115 = por %p113, %p114
      %s116 = ssub.s32 %s19, %s38
      %s117 = ssub.s32 %s20, %s34
      %s118 = sor.u32 %s116, %s117
      %s119 = ssub.s32 %s21, %s30
      %s120 = sor.u32 %s118, %s119
      %p121 = scmp.eq.s32.totalorder %s120, 0
      %s123 = sadd.s32 %s122, 1
      %s124 = scalar_select %p121, %s122, %s123
      %p127 = pneg %p121
      %p128 = scmp.eq.s32.totalorder %s12, 1
      %p129 = por %p127, %p128
      %p130 = scmp.ne.s32.totalorder %s122, %s125
      %p131 = scmp.eq.s32.totalorder %s12, 0
      %p132 = por %p130, %p131
      %p133 = scmp.ne.s32.totalorder %s122, %s125
      %p134 = scmp.eq.s32.totalorder %s17, 1
      %p135 = por %p133, %p134
      %p136 = scmp.ne.s32.totalorder %s125, %s126
      %p137 = scmp.eq.s32.totalorder %s17, 0
      %p138 = por %p136, %p137
      %p139 = scmp.ne.s32.totalorder %s125, %s126
      %p140 = scmp.eq.s32.totalorder %s18, 1
      %p141 = por %p139, %p140
      %p143 = scmp.ne.s32.totalorder %s126, %s142
      %p144 = scmp.eq.s32.totalorder %s18, 0
      %p145 = por %p143, %p144
      %p146 = scmp.le.s32.totalorder 1, %s12
      %p147 = scmp.lt.s32.totalorder %s12, 3
      %p148 = pnand %p146, %p147
      %p149 = pneg %p148
      // Predicated region
      $region9: #{tpu_custom_call.1} parent=5 // pred_check
        _
      $region10: #{tpu_custom_call.1} parent=5 // pred_check_branch
        %151 = sbr.rel (%p148) target = $region12
      $region11: #{tpu_custom_call.1} parent=5 // pred_region
        %s152 = ssub.s32 %s12, 1
        // Predicated region
        $region13: #{tpu_custom_call.1} parent=11 // pred_check
          %p153 = pneg %p80
        $region14: #{tpu_custom_call.1} parent=11 // pred_check_branch
          %155 = sbr.rel (%p153) target = $region16
        $region15: #{tpu_custom_call.1} parent=11 // pred_region
          _
        $region16: #{tpu_custom_call.1} parent=11 // pred_fallthru
          _
      $region12: #{tpu_custom_call.1} parent=5 // pred_fallthru
        _
      %p156 = scmp.lt.s32.totalorder %s12, 2
      // Predicated region
      $region17: #{tpu_custom_call.1} parent=5 // pred_check
        %p157 = pneg %p156
      $region18: #{tpu_custom_call.1} parent=5 // pred_check_branch
        %159 = sbr.rel (%p157) target = $region20
      $region19: #{tpu_custom_call.1} parent=5 // pred_region
        // Predicated region
        $region21: #{tpu_custom_call.1} parent=19 // pred_check
          %p160 = pneg %p53
        $region22: #{tpu_custom_call.1} parent=19 // pred_check_branch
          %162 = sbr.rel (%p160) target = $region24
        $region23: #{tpu_custom_call.1} parent=19 // pred_region
          %p163 = scmp.lt.s32.totalorder %s19, 1
          %s164 = scalar_select %p163, %s19, 1
          %p165 = scmp.lt.s32.totalorder %s20, 0
          %s166 = scalar_select %p165, %s20, 0
          %s167 = sadd.s32 %s166, %s164
          %s168 = smul.addr %s167, 8
          %s169 = scalar_lea.vmem %s0, %s168
        $region24: #{tpu_custom_call.1} parent=19 // pred_fallthru
          _
        // Predicated region
        $region25: #{tpu_custom_call.1} parent=19 // pred_check
          %p170 = pneg %p102
        $region26: #{tpu_custom_call.1} parent=19 // pred_check_branch
          %172 = sbr.rel (%p170) target = $region28
        $region27: #{tpu_custom_call.1} parent=19 // pred_region
          %p173 = scmp.lt.s32.totalorder %s19, 1
          %s174 = scalar_select %p173, %s19, 1
          %p175 = scmp.lt.s32.totalorder %s21, 0
          %s176 = scalar_select %p175, %s21, 0
          %s177 = sadd.s32 %s176, %s174
          %s178 = smul.addr %s177, 8
          %s179 = scalar_lea.vmem %s2, %s178
        $region28: #{tpu_custom_call.1} parent=19 // pred_fallthru
          _
      $region20: #{tpu_custom_call.1} parent=5 // pred_fallthru
        _
      %p180 = scmp.le.s32.totalorder 1, %s12
      %p181 = scmp.lt.s32.totalorder %s12, 3
      %p182 = pnand %p180, %p181
      %p183 = pneg %p182
      // Predicated region
      $region29: #{tpu_custom_call.1} parent=5 // pred_check
        _
      $region30: #{tpu_custom_call.1} parent=5 // pred_check_branch
        %185 = sbr.rel (%p182) target = $region32
      $region31: #{tpu_custom_call.1} parent=5 // pred_region
        %s186 = ssub.s32 %s12, 1
        %p187 = scmp.lt.s32.totalorder %s22, 1
        %s188 = scalar_select %p187, %s22, 1
        %p189 = scmp.lt.s32.totalorder %s23, 0
        %s190 = scalar_select %p189, %s23, 0
        %s191 = sadd.s32 %s190, %s188
        %s192 = smul.addr %s191, 8
        %s193 = scalar_lea.vmem %s0, %s192
        %p194 = pneg %p59
        %p195 = pneg %p56
        %p196 = pneg %p80
        %p197 = pneg %p77
        %p198 = scmp.lt.s32.totalorder %s22, 1
        %s199 = scalar_select %p198, %s22, 1
        %p200 = scmp.lt.s32.totalorder %s24, 0
        %s201 = scalar_select %p200, %s24, 0
        %s202 = sadd.s32 %s201, %s199
        %s203 = smul.addr %s202, 8
        %s204 = scalar_lea.vmem %s2, %s203
        %p205 = pneg %p108
        %p206 = pneg %p105
        %p207 = pneg %p138
        %p208 = pneg %p135
        %s209 = sand.u32 %s125, 1
        %s210 = scalar_lea.sflag [#allocation3], %s209
        %s211 = sand.u32 %s125, 1
        %s212 = smul.addr %s211, 32
        %s213 = scalar_lea.vmem [#allocation2], %s212
        %p214 = scmp.lt.s32.totalorder %s22, 1
        %s215 = scalar_select %p214, %s22, 1
        %p216 = scmp.lt.s32.totalorder %s23, 0
        %s217 = scalar_select %p216, %s23, 0
        %s218 = sadd.s32 %s217, %s215
        %s219 = smul.addr %s218, 8
        %s220 = scalar_lea.vmem %s0, %s219
        %p221 = scmp.lt.s32.totalorder %s22, 1
        %s222 = scalar_select %p221, %s22, 1
        %p223 = scmp.lt.s32.totalorder %s24, 0
        %s224 = scalar_select %p223, %s24, 0
        %s225 = sadd.s32 %s224, %s222
        %s226 = smul.addr %s225, 8
        %s227 = scalar_lea.vmem %s2, %s226
        %v228 = vld [vmem:[%s220] sm:$0xff]
        %v229 = vld [vmem:[%s227] sm:$0xff]
        %vm230 = vcmask 261120
        %v231 = vsel %vm230, %v228, 1.0
        %v232 = vsel %vm230, %v229, 1.0
        %v233 = vld [vmem:[%s1] sm:$0xff]
        %v234 = vld [vmem:[%s1 + $0x8] sm:$0xff]
        %v235 = vld [vmem:[%s1 + $0x10] sm:$0xff]
        %v236 = vld [vmem:[%s1 + $0x18] sm:$0xff]
        %v237 = vld [vmem:[%s1 + $0x20] sm:$0x1]
        %vm238 = vcmask 269312
        %v240 = vsel %vm238, %v231, 0
        %vm242 = vcmask 1040384
        %v244 = vsel %vm242, %v237, 0
        %246 = vmatpush.msra.mxu0 0.0
        %247 = vmatpush.msra.mxu0 0.0
        %248 = vmatpush.msra.mxu0 0.0
        %249 = vmatpush.msra.mxu0 0.0
        %250 = vmatpush.msra.mxu0 0.0
        %251 = vmatpush.msra.mxu0 0.0
        %252 = vmatpush.msra.mxu0 0.0
        %253 = vmatpush.msra.mxu0 0.0
        %254 = vmatpush.msra.mxu0 0.0
        %255 = vmatpush.msra.mxu0 0.0
        %256 = vmatpush.msra.mxu0 0.0
        %257 = vmatpush.msra.mxu0 %v244
        %258 = vmatpush.msra.mxu0 %v236
        %259 = vmatpush.msra.mxu0 %v235
        %260 = vmatpush.msra.mxu0 %v234
        %261 = vmatpush.msra.mxu0 %v233
        %262 = vmatmul.f32.gmra.mxu0 %v240
        %v263 = vpop.f32.mrf.mxu0
        %v264 = vadd.f32 0.0, %v263
        %265 = vdwg.mxu0
        %v267 = vsel %vm238, %v264, 0
        %v270 = vsel %vm238, %v232, 0
        %272 = vmatpush.xpose.msra.mxu0 0.0
        %273 = vmatpush.xpose.msra.mxu0 0.0
        %274 = vmatpush.xpose.msra.mxu0 0.0
        %275 = vmatpush.xpose.msra.mxu0 0.0
        %276 = vmatpush.xpose.msra.mxu0 0.0
        %277 = vmatpush.xpose.msra.mxu0 0.0
        %278 = vmatpush.xpose.msra.mxu0 0.0
        %279 = vmatpush.xpose.msra.mxu0 0.0
        %280 = vmatpush.xpose.msra.mxu0 0.0
        %281 = vmatpush.xpose.msra.mxu0 0.0
        %282 = vmatpush.xpose.msra.mxu0 0.0
        %283 = vmatpush.xpose.msra.mxu0 0.0
        %284 = vmatpush.xpose.msra.mxu0 0.0
        %285 = vmatpush.xpose.msra.mxu0 0.0
        %286 = vmatpush.xpose.msra.mxu0 0.0
        %287 = vmatpush.xpose.msra.mxu0 %v270
        %288 = vmatmul.f32.gmra.mxu0 %v267
        %v289 = vpop.f32.mrf.mxu0
        %v290 = vadd.f32 0.0, %v289
        %291 = vdwg.mxu0
        %vm292 = vcmask 64512
        %293 = vst.msk [vmem:[%s213] sm:$0xff] %vm292, %v290
        %s294 = scalar_lea.vmem %s1, 40
        %v295 = vld [vmem:[%s294] sm:$0xff]
        %v296 = vld [vmem:[%s294 + $0x8] sm:$0xff]
        %v297 = vld [vmem:[%s294 + $0x10] sm:$0xff]
        %v298 = vld [vmem:[%s294 + $0x18] sm:$0xff]
        %v299 = vld [vmem:[%s294 + $0x20] sm:$0x1]
        %v301 = vsel %vm242, %v299, 0
        %303 = vmatpush.msra.mxu0 0.0
        %304 = vmatpush.msra.mxu0 0.0
        %305 = vmatpush.msra.mxu0 0.0
        %306 = vmatpush.msra.mxu0 0.0
        %307 = vmatpush.msra.mxu0 0.0
        %308 = vmatpush.msra.mxu0 0.0
        %309 = vmatpush.msra.mxu0 0.0
        %310 = vmatpush.msra.mxu0 0.0
        %311 = vmatpush.msra.mxu0 0.0
        %312 = vmatpush.msra.mxu0 0.0
        %313 = vmatpush.msra.mxu0 0.0
        %314 = vmatpush.msra.mxu0 %v301
        %315 = vmatpush.msra.mxu0 %v298
        %316 = vmatpush.msra.mxu0 %v297
        %317 = vmatpush.msra.mxu0 %v296
        %318 = vmatpush.msra.mxu0 %v295
        %319 = vmatmul.f32.gmra.mxu0 %v240
        %v320 = vpop.f32.mrf.mxu0
        %v321 = vadd.f32 0.0, %v320
        %322 = vdwg.mxu0
        %v324 = vsel %vm238, %v321, 0
        %326 = vmatpush.xpose.msra.mxu0 0.0
        %327 = vmatpush.xpose.msra.mxu0 0.0
        %328 = vmatpush.xpose.msra.mxu0 0.0
        %329 = vmatpush.xpose.msra.mxu0 0.0
        %330 = vmatpush.xpose.msra.mxu0 0.0
        %331 = vmatpush.xpose.msra.mxu0 0.0
        %332 = vmatpush.xpose.msra.mxu0 0.0
        %333 = vmatpush.xpose.msra.mxu0 0.0
        %334 = vmatpush.xpose.msra.mxu0 0.0
        %335 = vmatpush.xpose.msra.mxu0 0.0
        %336 = vmatpush.xpose.msra.mxu0 0.0
        %337 = vmatpush.xpose.msra.mxu0 0.0
        %338 = vmatpush.xpose.msra.mxu0 0.0
        %339 = vmatpush.xpose.msra.mxu0 0.0
        %340 = vmatpush.xpose.msra.mxu0 0.0
        %341 = vmatpush.xpose.msra.mxu0 %v270
        %342 = vmatmul.f32.gmra.mxu0 %v324
        %v343 = vpop.f32.mrf.mxu0
        %v344 = vadd.f32 0.0, %v343
        %345 = vdwg.mxu0
        %s346 = scalar_lea.vmem %s213, 8 [#allocation2]
        %347 = vst.msk [vmem:[%s346] sm:$0xff] %vm292, %v344
        %s348 = scalar_lea.vmem %s1, 80
        %v349 = vld [vmem:[%s348] sm:$0xff]
        %v350 = vld [vmem:[%s348 + $0x8] sm:$0xff]
        %v351 = vld [vmem:[%s348 + $0x10] sm:$0xff]
        %v352 = vld [vmem:[%s348 + $0x18] sm:$0xff]
        %v353 = vld [vmem:[%s348 + $0x20] sm:$0x1]
        %v355 = vsel %vm242, %v353, 0
        %357 = vmatpush.msra.mxu0 0.0
        %358 = vmatpush.msra.mxu0 0.0
        %359 = vmatpush.msra.mxu0 0.0
        %360 = vmatpush.msra.mxu0 0.0
        %361 = vmatpush.msra.mxu0 0.0
        %362 = vmatpush.msra.mxu0 0.0
        %363 = vmatpush.msra.mxu0 0.0
        %364 = vmatpush.msra.mxu0 0.0
        %365 = vmatpush.msra.mxu0 0.0
        %366 = vmatpush.msra.mxu0 0.0
        %367 = vmatpush.msra.mxu0 0.0
        %368 = vmatpush.msra.mxu0 %v355
        %369 = vmatpush.msra.mxu0 %v352
        %370 = vmatpush.msra.mxu0 %v351
        %371 = vmatpush.msra.mxu0 %v350
        %372 = vmatpush.msra.mxu0 %v349
        %373 = vmatmul.f32.gmra.mxu0 %v240
        %v374 = vpop.f32.mrf.mxu0
        %v375 = vadd.f32 0.0, %v374
        %376 = vdwg.mxu0
        %v378 = vsel %vm238, %v375, 0
        %380 = vmatpush.xpose.msra.mxu0 0.0
        %381 = vmatpush.xpose.msra.mxu0 0.0
        %382 = vmatpush.xpose.msra.mxu0 0.0
        %383 = vmatpush.xpose.msra.mxu0 0.0
        %384 = vmatpush.xpose.msra.mxu0 0.0
        %385 = vmatpush.xpose.msra.mxu0 0.0
        %386 = vmatpush.xpose.msra.mxu0 0.0
        %387 = vmatpush.xpose.msra.mxu0 0.0
        %388 = vmatpush.xpose.msra.mxu0 0.0
        %389 = vmatpush.xpose.msra.mxu0 0.0
        %390 = vmatpush.xpose.msra.mxu0 0.0
        %391 = vmatpush.xpose.msra.mxu0 0.0
        %392 = vmatpush.xpose.msra.mxu0 0.0
        %393 = vmatpush.xpose.msra.mxu0 0.0
        %394 = vmatpush.xpose.msra.mxu0 0.0
        %395 = vmatpush.xpose.msra.mxu0 %v270
        %396 = vmatmul.f32.gmra.mxu0 %v378
        %v397 = vpop.f32.mrf.mxu0
        %v398 = vadd.f32 0.0, %v397
        %399 = vdwg.mxu0
        %s400 = scalar_lea.vmem %s213, 16 [#allocation2]
        %401 = vst.msk [vmem:[%s400] sm:$0xff] %vm292, %v398
        %s402 = scalar_lea.vmem %s1, 120
        %v403 = vld [vmem:[%s402] sm:$0xff]
        %v404 = vld [vmem:[%s402 + $0x8] sm:$0xff]
        %v405 = vld [vmem:[%s402 + $0x10] sm:$0xff]
        %v406 = vld [vmem:[%s402 + $0x18] sm:$0xff]
        %v407 = vld [vmem:[%s402 + $0x20] sm:$0x1]
        %v409 = vsel %vm242, %v407, 0
        %411 = vmatpush.msra.mxu0 0.0
        %412 = vmatpush.msra.mxu0 0.0
        %413 = vmatpush.msra.mxu0 0.0
        %414 = vmatpush.msra.mxu0 0.0
        %415 = vmatpush.msra.mxu0 0.0
        %416 = vmatpush.msra.mxu0 0.0
        %417 = vmatpush.msra.mxu0 0.0
        %418 = vmatpush.msra.mxu0 0.0
        %419 = vmatpush.msra.mxu0 0.0
        %420 = vmatpush.msra.mxu0 0.0
        %421 = vmatpush.msra.mxu0 0.0
        %422 = vmatpush.msra.mxu0 %v409
        %423 = vmatpush.msra.mxu0 %v406
        %424 = vmatpush.msra.mxu0 %v405
        %425 = vmatpush.msra.mxu0 %v404
        %426 = vmatpush.msra.mxu0 %v403
        %427 = vmatmul.f32.gmra.mxu0 %v240
        %v428 = vpop.f32.mrf.mxu0
        %v429 = vadd.f32 0.0, %v428
        %430 = vdwg.mxu0
        %v432 = vsel %vm238, %v429, 0
        %434 = vmatpush.xpose.msra.mxu0 0.0
        %435 = vmatpush.xpose.msra.mxu0 0.0
        %436 = vmatpush.xpose.msra.mxu0 0.0
        %437 = vmatpush.xpose.msra.mxu0 0.0
        %438 = vmatpush.xpose.msra.mxu0 0.0
        %439 = vmatpush.xpose.msra.mxu0 0.0
        %440 = vmatpush.xpose.msra.mxu0 0.0
        %441 = vmatpush.xpose.msra.mxu0 0.0
        %442 = vmatpush.xpose.msra.mxu0 0.0
        %443 = vmatpush.xpose.msra.mxu0 0.0
        %444 = vmatpush.xpose.msra.mxu0 0.0
        %445 = vmatpush.xpose.msra.mxu0 0.0
        %446 = vmatpush.xpose.msra.mxu0 0.0
        %447 = vmatpush.xpose.msra.mxu0 0.0
        %448 = vmatpush.xpose.msra.mxu0 0.0
        %449 = vmatpush.xpose.msra.mxu0 %v270
        %450 = vmatmul.f32.gmra.mxu0 %v432
        %v451 = vpop.f32.mrf.mxu0
        %v452 = vadd.f32 0.0, %v451
        %453 = vdwg.mxu0
        %s454 = scalar_lea.vmem %s213, 24 [#allocation2]
        %455 = vst.msk [vmem:[%s454] sm:$0xff] %vm292, %v452
        %s456 = sand.u32 %s125, 1
        %s457 = scalar_lea.sflag [#allocation3], %s456
        %s458 = sand.u32 %s125, 1
        %s459 = smul.addr %s458, 32
        %s460 = scalar_lea.vmem [#allocation2], %s459
        // Predicated region
        $region33: #{tpu_custom_call.1} parent=31 // pred_check
          %p461 = pneg %p135
        $region34: #{tpu_custom_call.1} parent=31 // pred_check_branch
          %463 = sbr.rel (%p461) target = $region36
        $region35: #{tpu_custom_call.1} parent=31 // pred_region
          %465 = vsyncadd %s457, 0
          %s466 = sadd.s32 %s24, %s23
          %s467 = smul.addr %s22, 4
          %s468 = sadd.s32 %s466, %s467
          %s469 = smul.addr %s468, 8
          %s470 = scalar_lea.hbm %s3, %s469
          %s471 = sshll.u32 %s460, 4
          %s472 = int_to_ptr.vmem [resolvable:$true] %s471
          %s473 = sshll.u32 %s470, 4
          %s474 = int_to_ptr.hbm [resolvable:$true] %s473
          %479 = dma.vmem_to_hbm [thread:$0]  %s472, 512, %s474, %s457, 128, 128, 8
        $region36: #{tpu_custom_call.1} parent=31 // pred_fallthru
          _
      $region32: #{tpu_custom_call.1} parent=5 // pred_fallthru
        _
      %p480 = scmp.le.s32.totalorder 2, %s12
      // Predicated region
      $region37: #{tpu_custom_call.1} parent=5 // pred_check
        %p481 = pneg %p480
      $region38: #{tpu_custom_call.1} parent=5 // pred_check_branch
        %483 = sbr.rel (%p481) target = $region40
      $region39: #{tpu_custom_call.1} parent=5 // pred_region
        %s484 = ssub.s32 %s12, 2
        // Predicated region
        $region41: #{tpu_custom_call.1} parent=39 // pred_check
          %p485 = pneg %p141
        $region42: #{tpu_custom_call.1} parent=39 // pred_check_branch
          %487 = sbr.rel (%p485) target = $region44
        $region43: #{tpu_custom_call.1} parent=39 // pred_region
          %s488 = sand.u32 %s126, 1
          %s489 = scalar_lea.sflag [#allocation3], %s488
          %s490 = sand.u32 %s126, 1
          %s491 = smul.addr %s490, 32
          %s492 = scalar_lea.vmem [#allocation2], %s491
          %494 = dma.done %s489, 512
        $region44: #{tpu_custom_call.1} parent=39 // pred_fallthru
          _
      $region40: #{tpu_custom_call.1} parent=5 // pred_fallthru
        _
    $region6: #{tpu_custom_call.1} parent=1 // loop_footer
      %s16 = sadd.s32 1, %s12
    $region7: #{tpu_custom_call.1} parent=1 // loop_footer_branch
      %11 = sbr.rel target = $region3
    $region8: #{tpu_custom_call.1} parent=1 // loop_exit
      _
    %495 = vsyncpa [#allocation3], 1
    %s496 = scalar_lea.sflag [#allocation3], 1
    %497 = vsyncpa %s496, 1

</llo_original>
